<compile_context>
chip_gen: v7x
topology: tpu7x:2x2x1
jax: 0.10.0
libtpu: 0.0.40
codegen_flags: <defaults>
</compile_context>

<pallas_src>
import jax
import jax.numpy as jnp
from jax.experimental import pallas as pl
from jax.experimental.pallas import tpu as pltpu

_LANES = 128


def _linreg_kernel(x_ref, w_ref, b_ref, o_ref):
    # x_ref: (block_rows, 128) VMEM tile; w_ref, b_ref: (1, 1) SMEM scalars.
    w = w_ref[0, 0]
    b = b_ref[0, 0]
    o_ref[...] = x_ref[...] * w + b


def one_linear_regression(x, w, b, *, max_block_rows=4096):
    """Forward of nn.Linear(1, 1): y = x @ W^T + b.

    x: (N, 1) float32
    w: (1, 1) float32  (PyTorch weight shape [out_features, in_features])
    b: (1,)   float32
    returns: (N, 1) float32
    """
    n = x.shape[0]
    dtype = x.dtype

    # ---- lane-dense repacking: (N, 1) -> (rows, 128) ------------------------
    rows = max(pl.cdiv(n, _LANES), 1)
    n_packed = rows * _LANES
    needs_pad = n_packed != n

    x_flat = jnp.ravel(x)                      # free layout change of (N, 1)
    if needs_pad:
        # Pad only to the next multiple of 128 elements (<= 127 extras).
        x_flat = jnp.pad(x_flat, (0, n_packed - n))
    x_packed = x_flat.reshape(rows, _LANES)

    # Block selection: a single full-array block when it fits, otherwise
    # 4096-row (2 MiB) tiles; the last grid block may be ragged (Pallas masks
    # out-of-bounds output writes, and the padded lanes are trimmed anyway).
    if rows <= max_block_rows:
        block_rows = rows                      # block == full array: always legal
    else:
        block_rows = max_block_rows            # multiple of 8 -> (8,128)-aligned
    grid = (pl.cdiv(rows, block_rows),)

    # Scalars for SMEM (read once via the scalar path inside the kernel).
    w_s = w.reshape(1, 1).astype(dtype)
    b_s = b.reshape(1, 1).astype(dtype)

    out_packed = pl.pallas_call(
        _linreg_kernel,
        out_shape=jax.ShapeDtypeStruct((rows, _LANES), dtype),
        grid=grid,
        in_specs=[
            pl.BlockSpec((block_rows, _LANES), lambda i: (i, 0)),
            pl.BlockSpec(memory_space=pltpu.MemorySpace.SMEM),
            pl.BlockSpec(memory_space=pltpu.MemorySpace.SMEM),
        ],
        out_specs=pl.BlockSpec((block_rows, _LANES), lambda i: (i, 0)),
        compiler_params=pltpu.CompilerParams(
            dimension_semantics=("parallel",),
        ),
        cost_estimate=pl.CostEstimate(
            flops=2 * n_packed,
            transcendentals=0,
            bytes_accessed=8 * n_packed,       # 4 B read + 4 B write per elem
        ),
        # Only donate when x_packed is a fresh padded temporary owned by this
        # wrapper; in the fast path it may share the caller's buffer.
        input_output_aliases=({0: 0} if needs_pad else {}),
    )(x_packed, w_s, b_s)

    # Restore the (N, 1) layout expected by the module.
    if needs_pad:
        return out_packed.reshape(-1)[:n].reshape(n, 1)
    return out_packed.reshape(n, 1)            # free: no pad, no slice


if __name__ == "__main__":
    key = jax.random.PRNGKey(0)
    kx, kw, kb = jax.random.split(key, 3)

    # Deterministic parameter init mimicking PyTorch's Linear default:
    # uniform(-1/sqrt(fan_in), 1/sqrt(fan_in)) with fan_in = 1.
    w = jax.random.uniform(kw, (1, 1), dtype=jnp.float32, minval=-1.0, maxval=1.0)
    b = jax.random.uniform(kb, (1,), dtype=jnp.float32, minval=-1.0, maxval=1.0)

    # Case 1: small batch (exercises the pad + trim path), matching the
    # Linear(1, 1) input convention.
    n_small = 8
    x_small = jax.random.normal(kx, (n_small, 1), dtype=jnp.float32)
    out_small = jax.block_until_ready(one_linear_regression(x_small, w, b))
    ref_small = x_small @ w.T + b
    assert out_small.shape == (n_small, 1)
    assert jnp.allclose(out_small, ref_small, atol=1e-6), "mismatch (pad path)"

    # Case 2: multiple-of-128 batch (exercises the zero-copy fast path).
    n_fast = 1024
    x_fast = jax.random.normal(kx, (n_fast, 1), dtype=jnp.float32)
    out_fast = jax.block_until_ready(one_linear_regression(x_fast, w, b))
    ref_fast = x_fast @ w.T + b
    assert out_fast.shape == (n_fast, 1)
    assert jnp.allclose(out_fast, ref_fast, atol=1e-6), "mismatch (fast path)"

    print("KERNEL_OK")
</pallas_src>

<mosaic_0001>
module attributes {stable_mosaic.version = 11 : i64} {
  func.func @_linreg_kernel(%arg0: i32, %arg1: memref<1x128xf32, #tpu.memory_space<vmem>>, %arg2: memref<1x1xf32, #tpu.memory_space<smem>>, %arg3: memref<1x1xf32, #tpu.memory_space<smem>>, %arg4: memref<1x128xf32, #tpu.memory_space<vmem>>) attributes {dimension_semantics = [#tpu.dimension_semantics<parallel>], iteration_bounds = array<i64: 1>, scalar_prefetch = 0 : i64, scratch_operands = 0 : i64, tpu.core_type = #tpu.core_type<tc>, window_params = [{transform_indices = @transform_0, window_bounds = array<i64: 1, 128>}, {transform_indices = @transform_1, window_bounds = array<i64: 1, 1>}, {transform_indices = @transform_2, window_bounds = array<i64: 1, 1>}, {transform_indices = @transform_3, window_bounds = array<i64: 1, 128>}]} {
    %c0 = arith.constant 0 : index
    %c0_0 = arith.constant 0 : index
    %0 = memref.load %arg2[%c0, %c0_0] : memref<1x1xf32, #tpu.memory_space<smem>>
    %c0_1 = arith.constant 0 : index
    %c0_2 = arith.constant 0 : index
    %1 = memref.load %arg3[%c0_1, %c0_2] : memref<1x1xf32, #tpu.memory_space<smem>>
    %c0_3 = arith.constant 0 : index
    %c0_4 = arith.constant 0 : index
    %2 = vector.load %arg1[%c0_3, %c0_4] : memref<1x128xf32, #tpu.memory_space<vmem>>, vector<1x128xf32>
    %3 = vector.broadcast %0 : f32 to vector<1x128xf32>
    %4 = arith.mulf %2, %3 : vector<1x128xf32>
    %5 = vector.broadcast %1 : f32 to vector<1x128xf32>
    %6 = arith.addf %4, %5 : vector<1x128xf32>
    %c0_5 = arith.constant 0 : index
    %c0_6 = arith.constant 0 : index
    %7 = vector.load %arg4[%c0_5, %c0_6] : memref<1x128xf32, #tpu.memory_space<vmem>>, vector<1x128xf32>
    tpu.vector_store %arg4[%c0_5, %c0_6], %6 {strides = array<i32>} : memref<1x128xf32, #tpu.memory_space<vmem>>, vector<1x128xf32>,
    return
  }
  func.func @transform_0(%arg0: i32) -> (i32, i32) {
    %c0_i32 = arith.constant 0 : i32
    %c0_i32_0 = arith.constant 0 : i32
    return %arg0, %c0_i32 : i32, i32
  }
  func.func @transform_1(%arg0: i32) -> (i32, i32) {
    %c0_i32 = arith.constant 0 : i32
    %c0_i32_0 = arith.constant 0 : i32
    %c0_i32_1 = arith.constant 0 : i32
    return %c0_i32, %c0_i32_0 : i32, i32
  }
  func.func @transform_2(%arg0: i32) -> (i32, i32) {
    %c0_i32 = arith.constant 0 : i32
    %c0_i32_0 = arith.constant 0 : i32
    %c0_i32_1 = arith.constant 0 : i32
    return %c0_i32, %c0_i32_0 : i32, i32
  }
  func.func @transform_3(%arg0: i32) -> (i32, i32) {
    %c0_i32 = arith.constant 0 : i32
    %c0_i32_0 = arith.constant 0 : i32
    return %arg0, %c0_i32 : i32, i32
  }
}

</mosaic_0001>

<llo_original>
// kernel: tpu_custom_call.1
$region0: #{tpu_custom_call.1}
  #allocation0 [shape = 'u32[]', space=smem, size = 0x4, offset = 0x4, fixed_abs, tag = 'smem constant byte address 0x4 - core index']
  #allocation1 [shape = 'u32[144,128]{1,0:T(1,128)}', space=vmem, size = 0x12000, scoped, tag = 'internal scratch']
  #allocation2 [shape = 'f32[1,1]{1,0:T(1,128)S(6)}', space=smem, size = 0x200, scoped, tag = 'scoped memory for tpu_custom_call.1']
  #allocation3 [shape = 'f32[1,1]{1,0:T(1,128)S(6)}', space=smem, size = 0x200, scoped, tag = 'scoped memory for tpu_custom_call.1']
  %s0 = inlined_call_operand.hbm [shape: f32[1,128], index: 0, kind: input, shape index: {}, may-alias: {0,3}]
  %s1 = inlined_call_operand.<no memory space> [shape: f32[1,1], index: 1, kind: input, shape index: {}]
  %s2 = inlined_call_operand.<no memory space> [shape: f32[1,1], index: 2, kind: input, shape index: {}]
  %s3 = inlined_call_operand.hbm [shape: f32[1,128], index: 3, kind: output, shape index: {}, may-alias: {0,3}]
  %s4 = sld [smem:[#allocation0]]
  $region26: #{tpu_custom_call.1} parent=0
    _
  %s6 = ssub.s32 1, %s4
  %s7 = scalar_select 0, %s6, %s4
  %8 = sst [smem:[#allocation2]] %s1
  %9 = sst [smem:[#allocation3]] %s2
  $region1: #{tpu_custom_call.1} parent=0
    #allocation4 [shape = 'u8[512]{0}', space=vmem, size = 0x400, scoped, tag = 'input window, operand 0, single buffered']
    #allocation5 [shape = 's32[1]{0}', space=sflag, size = 0x4, scoped, tag = 'scoped memory for tpu_custom_call.1']
    #allocation6 [shape = 's32[1]{0}', space=sflag, size = 0x4, scoped, tag = 'scoped memory for tpu_custom_call.1']
    #allocation7 [shape = 'u8[512]{0}', space=vmem, size = 0x400, scoped, tag = 'output window, operand 0, single buffered']
    %10 = vsyncpa [#allocation5], 0
    %11 = vsyncpa [#allocation6], 0
    // Predicated region
    $region2: #{tpu_custom_call.1} parent=1 // pred_check
      _
    $region3: #{tpu_custom_call.1} parent=1 // pred_check_branch
      %13 = sbr.rel (0) target = $region5
    $region4: #{tpu_custom_call.1} parent=1 // pred_region
      %s15 = ssub.s32 16, 16
      %16 = vsyncadd [#allocation5], %s15
      %s18 = sshll.u32 [#allocation4], 4
      %s19 = int_to_ptr.vmem [resolvable:$true] %s18
      %21 = dma.hbm_to_vmem [thread:$0]  %s0, 16, %s19, [#allocation5]
    $region5: #{tpu_custom_call.1} parent=1 // pred_fallthru
      _
    // Predicated region
    $region6: #{tpu_custom_call.1} parent=1 // pred_check
      _
    $region7: #{tpu_custom_call.1} parent=1 // pred_check_branch
      %23 = sbr.rel (0) target = $region9
    $region8: #{tpu_custom_call.1} parent=1 // pred_region
      _
    $region9: #{tpu_custom_call.1} parent=1 // pred_fallthru
      _
    // Predicated region
    $region10: #{tpu_custom_call.1} parent=1 // pred_check
      _
    $region11: #{tpu_custom_call.1} parent=1 // pred_check_branch
      %25 = sbr.rel (0) target = $region13
    $region12: #{tpu_custom_call.1} parent=1 // pred_region
      _
    $region13: #{tpu_custom_call.1} parent=1 // pred_fallthru
      _
    // Predicated region
    $region14: #{tpu_custom_call.1} parent=1 // pred_check
      _
    $region15: #{tpu_custom_call.1} parent=1 // pred_check_branch
      %27 = sbr.rel (0) target = $region17
    $region16: #{tpu_custom_call.1} parent=1 // pred_region
      %28 = dma.done [#allocation5], 16
    $region17: #{tpu_custom_call.1} parent=1 // pred_fallthru
      _
    %s29 = sld [smem:[#allocation2]]
    %s30 = sld [smem:[#allocation3]]
    %v31 = vld [vmem:[#allocation4] sm:$0x1]
    %v32 = vstv %s29
    %v33 = vmul.f32 %v31, %v32
    %v34 = vstv %s30
    %v35 = vadd.f32 %v33, %v34
    %36 = vst [vmem:[#allocation7] sm:$0x1] %v35
    // Predicated region
    $region18: #{tpu_custom_call.1} parent=1 // pred_check
      _
    $region19: #{tpu_custom_call.1} parent=1 // pred_check_branch
      %38 = sbr.rel (0) target = $region21
    $region20: #{tpu_custom_call.1} parent=1 // pred_region
      %s40 = ssub.s32 16, 16
      %41 = vsyncadd [#allocation6], %s40
      %s43 = sshll.u32 [#allocation7], 4
      %s44 = int_to_ptr.vmem [resolvable:$true] %s43
      %46 = dma.vmem_to_hbm [thread:$0]  %s44, 16, %s3, [#allocation6]
    $region21: #{tpu_custom_call.1} parent=1 // pred_fallthru
      _
    // Predicated region
    $region22: #{tpu_custom_call.1} parent=1 // pred_check
      _
    $region23: #{tpu_custom_call.1} parent=1 // pred_check_branch
      %48 = sbr.rel (0) target = $region25
    $region24: #{tpu_custom_call.1} parent=1 // pred_region
      %49 = dma.done [#allocation6], 16
    $region25: #{tpu_custom_call.1} parent=1 // pred_fallthru
      _
    %50 = vsyncpa [#allocation5], 1
    %51 = vsyncpa [#allocation6], 1

</llo_original>
